<compile_context>
chip_gen: v6e
topology: v6e:2x2x1
jax: 0.10.0
libtpu: 0.0.40
codegen_flags: <defaults>
</compile_context>

<pallas_src>
import functools

import jax
import jax.numpy as jnp
from jax import lax
from jax.experimental import pallas as pl
from jax.experimental.pallas import tpu as pltpu

_EPS = 1e-7                 # smp DiceLoss default eps (smooth defaults to 0.0)
_LANE = 128
_PAD_LOGIT = -1e4           # sigmoid(_PAD_LOGIT) == 0 -> padded lanes contribute nothing
_DEFAULT_MAX_ROW_TILE = 2048
_ROW_ALIGN = 16             # valid (8,128)/(16,128) blocks for both f32 and bf16


def _round_up(x, m):
    return ((x + m - 1) // m) * m


def _dice_partials_kernel(ml_ref, mt_ref, inter_ref, psum_ref, tsum_ref, *,
                          rows_total, r_tile, need_row_mask, acc_sub):
    """Accumulate per-(class, sample-chunk) partial sums over the spatial row tiles."""
    ri = pl.program_id(2)

    @pl.when(ri == 0)
    def _():
        inter_ref[...] = jnp.zeros_like(inter_ref)
        psum_ref[...] = jnp.zeros_like(psum_ref)
        tsum_ref[...] = jnp.zeros_like(tsum_ref)

    # (n_tile, r_tile, 128) tiles; cast per tile (masks stream in their narrow dtype).
    # NOTE(v6e/v7x): could keep sigmoid / product in bf16 if VALU/EUP ever saturates;
    # the kernel is HBM-bound so f32 math is kept (mandatory on v5e anyway).
    p = jax.nn.sigmoid(ml_ref[...].astype(jnp.float32))
    t = mt_ref[...].astype(jnp.float32)

    if need_row_mask:
        # Tail row-tile: rows beyond `rows_total` are uninitialized padding -> zero them.
        rows_valid = rows_total - ri * r_tile
        row_idx = lax.broadcasted_iota(jnp.int32, p.shape, dimension=1)
        valid = row_idx < rows_valid
        p = jnp.where(valid, p, 0.0)
        t = jnp.where(valid, t, 0.0)

    def fold(x):
        # (n_tile, r_tile, 128) -> (acc_sub, 128) using only vreg-wise VPU adds when
        # r_tile is 8-aligned; the final cross-lane reduce happens in the wrapper.
        x = x.sum(axis=0)                                   # collapse samples: VPU adds
        if acc_sub == 8:
            return x.reshape(-1, 8, _LANE).sum(axis=0)      # tile-aligned view, VPU adds
        return jnp.sum(x, axis=0, keepdims=True)            # tiny r_tile fallback

    inter_ref[...] += fold(p * t)
    psum_ref[...] += fold(p)
    tsum_ref[...] += fold(t)


def _mask_spec(block_shape, index_map, total_steps):
    # Triple-buffer the mask streams on non-trivial grids (compute per tile is tiny,
    # so the pipeline is DMA-latency limited at tile boundaries).
    if total_steps >= 4:
        try:
            return pl.BlockSpec(block_shape, index_map, pipeline_mode=pl.Buffered(3))
        except (TypeError, AttributeError):
            pass
    return pl.BlockSpec(block_shape, index_map)


@functools.partial(jax.jit,
                   static_argnames=("mask_head", "dice_weight", "max_row_tile"))
def custom_loss(outputs, targets, masks_outputs, masks_targets,
                mask_head=True, dice_weight=0.1, max_row_tile=_DEFAULT_MAX_ROW_TILE):
    """BCEWithLogits(outputs, targets)
       + dice_weight * multilabel soft Dice(masks_outputs, masks_targets.flatten(0,1))."""
    # --- BCEWithLogits on the tiny (B, K) classification head: plain-JAX epilogue ---
    x = outputs.astype(jnp.float32)
    y = targets.astype(jnp.float32)
    bce = jnp.mean(jnp.maximum(x, 0.0) - x * y + jnp.log1p(jnp.exp(-jnp.abs(x))))
    if not mask_head:
        return bce

    mo = masks_outputs                                               # (N, C, H, W)
    mt = masks_targets.reshape((-1,) + masks_targets.shape[2:])      # (N, C, H, W)
    n, c, h, w = mo.shape
    hw = h * w
    mo = mo.reshape(n, c, hw)
    mt = mt.reshape(n, c, hw)
    if hw % _LANE != 0:
        # TODO(synk): mask the lane tail in-kernel instead; this pad is an extra HBM
        # pass over both mask tensors (only triggers when H*W is not a 128 multiple).
        pad = _LANE - hw % _LANE
        mo = jnp.pad(mo, ((0, 0), (0, 0), (0, pad)), constant_values=_PAD_LOGIT)
        mt = jnp.pad(mt, ((0, 0), (0, 0), (0, pad)))
        hw += pad
    rows = hw // _LANE
    mo = mo.reshape(n, c, rows, _LANE)     # contiguous reshape: free, no transpose
    mt = mt.reshape(n, c, rows, _LANE)

    # --- tiling: full-extent or 16-aligned row tiles; sample tiling when H*W small ---
    if rows <= max_row_tile:
        r_tile = rows                               # single tile, alignment-exempt
        cap = max(1, min(n, max_row_tile // rows))
        n_tile = 1
        for d in range(cap, 0, -1):                 # largest divisor of N under budget
            if n % d == 0:
                n_tile = d
                break
    else:
        k = pl.cdiv(rows, max_row_tile)             # even split -> minimal tail waste
        r_tile = _round_up(pl.cdiv(rows, k), _ROW_ALIGN)
        n_tile = 1
    grid_r = pl.cdiv(rows, r_tile)
    grid_n = n // n_tile
    grid = (c, grid_n, grid_r)
    total_steps = c * grid_n * grid_r
    need_row_mask = (rows % r_tile) != 0
    acc_sub = 8 if r_tile % 8 == 0 else 1

    kernel = functools.partial(
        _dice_partials_kernel,
        rows_total=rows, r_tile=r_tile,
        need_row_mask=need_row_mask, acc_sub=acc_sub)

    part_shape = jax.ShapeDtypeStruct((c, grid_n, acc_sub, _LANE), jnp.float32)
    part_spec = pl.BlockSpec((None, None, acc_sub, _LANE),
                             lambda ci, ni, ri: (ci, ni, 0, 0))
    mask_block = (n_tile, None, r_tile, _LANE)
    mask_map = lambda ci, ni, ri: (ni, ci, ri, 0)

    inter_p, psum_p, tsum_p = pl.pallas_call(
        kernel,
        out_shape=(part_shape, part_shape, part_shape),
        grid=grid,
        in_specs=[_mask_spec(mask_block, mask_map, total_steps),
                  _mask_spec(mask_block, mask_map, total_steps)],
        out_specs=(part_spec, part_spec, part_spec),
        compiler_params=pltpu.CompilerParams(
            dimension_semantics=("parallel", "parallel", "arbitrary")),
    )(mo, mt)

    # --- finalize dice + combine (tiny arrays; lets c/n stay "parallel" in-kernel) ---
    inter_c = jnp.sum(inter_p, axis=(1, 2, 3))
    psum_c = jnp.sum(psum_p, axis=(1, 2, 3))
    tsum_c = jnp.sum(tsum_p, axis=(1, 2, 3))
    card = psum_c + tsum_c                               # == sum(p + t)
    dice = (2.0 * inter_c) / jnp.maximum(card, _EPS)
    per_class = (1.0 - dice) * (tsum_c > 0.0).astype(jnp.float32)
    return bce + dice_weight * jnp.mean(per_class)


def _reference_loss(outputs, targets, masks_outputs, masks_targets, mask_head=True):
    # Pure-JAX reference mirroring nn.BCEWithLogitsLoss + smp DiceLoss(MULTILABEL).
    x = outputs.astype(jnp.float32)
    t = targets.astype(jnp.float32)
    bce = jnp.mean(jnp.maximum(x, 0.0) - x * t + jnp.log1p(jnp.exp(-jnp.abs(x))))
    if not mask_head:
        return bce
    mo = masks_outputs.astype(jnp.float32)
    mt = masks_targets.astype(jnp.float32).reshape((-1,) + masks_targets.shape[2:])
    n, c = mo.shape[:2]
    p = jax.nn.sigmoid(mo).reshape(n, c, -1)
    tr = mt.reshape(n, c, -1)
    inter = jnp.sum(p * tr, axis=(0, 2))
    card = jnp.sum(p + tr, axis=(0, 2))
    dice = (2.0 * inter) / jnp.clip(card, _EPS, None)
    per_class = (1.0 - dice) * (jnp.sum(tr, axis=(0, 2)) > 0).astype(jnp.float32)
    return bce + 0.1 * jnp.mean(per_class)


if __name__ == "__main__":
    key = jax.random.PRNGKey(0)
    k1, k2, k3, k4, k5, k6 = jax.random.split(key, 6)

    B, K = 2, 4          # classification head
    T, C, H, W = 2, 3, 16, 16
    N = B * T

    outputs = jax.random.normal(k1, (B, K), jnp.float32)
    targets = (jax.random.uniform(k2, (B, K)) > 0.5).astype(jnp.float32)
    # Mask tensors stay in narrow dtypes; the kernel upcasts per tile (halved HBM bytes).
    masks_outputs = jax.random.normal(k3, (N, C, H, W), jnp.float32).astype(jnp.bfloat16)
    masks_targets = (jax.random.uniform(k4, (B, T, C, H, W)) > 0.5).astype(jnp.bfloat16)

    loss = jax.block_until_ready(
        custom_loss(outputs, targets, masks_outputs, masks_targets, mask_head=True))
    ref = _reference_loss(outputs, targets, masks_outputs, masks_targets, mask_head=True)
    assert jnp.allclose(loss, ref, rtol=1e-5, atol=1e-5), (loss, ref)

    loss_bce = jax.block_until_ready(
        custom_loss(outputs, targets, masks_outputs, masks_targets, mask_head=False))
    ref_bce = _reference_loss(outputs, targets, masks_outputs, masks_targets, mask_head=False)
    assert jnp.allclose(loss_bce, ref_bce, rtol=1e-5, atol=1e-5), (loss_bce, ref_bce)

    # Exercise the lane-pad + cdiv row-grid + in-kernel tail-row-mask paths (small scale):
    # H*W = 3136 -> lane-padded to 3200 -> rows = 25; max_row_tile=16 -> 2 row tiles.
    H2 = W2 = 56
    masks_outputs2 = jax.random.normal(k5, (N, C, H2, W2), jnp.float32)
    masks_targets2 = (jax.random.uniform(k6, (B, T, C, H2, W2)) > 0.5).astype(jnp.float32)
    loss2 = jax.block_until_ready(
        custom_loss(outputs, targets, masks_outputs2, masks_targets2,
                    mask_head=True, max_row_tile=16))
    ref2 = _reference_loss(outputs, targets, masks_outputs2, masks_targets2, mask_head=True)
    assert jnp.allclose(loss2, ref2, rtol=1e-5, atol=1e-5), (loss2, ref2)

    print("KERNEL_OK")
</pallas_src>

<mosaic_0001>
module attributes {stable_mosaic.version = 11 : i64} {
  func.func @_dice_partials_kernel(%arg0: i32, %arg1: i32, %arg2: i32, %arg3: memref<4x1x2x128xbf16, #tpu.memory_space<vmem>>, %arg4: memref<4x1x2x128xbf16, #tpu.memory_space<vmem>>, %arg5: memref<1x1x1x128xf32, #tpu.memory_space<vmem>>, %arg6: memref<1x1x1x128xf32, #tpu.memory_space<vmem>>, %arg7: memref<1x1x1x128xf32, #tpu.memory_space<vmem>>) attributes {dimension_semantics = [#tpu.dimension_semantics<parallel>, #tpu.dimension_semantics<parallel>, #tpu.dimension_semantics<arbitrary>], iteration_bounds = array<i64: 3, 1, 1>, scalar_prefetch = 0 : i64, scratch_operands = 0 : i64, tpu.core_type = #tpu.core_type<tc>, window_params = [{transform_indices = @transform_0, window_bounds = array<i64: 4, 1, 2, 128>}, {transform_indices = @transform_1, window_bounds = array<i64: 4, 1, 2, 128>}, {transform_indices = @transform_2, window_bounds = array<i64: 1, 1, 1, 128>}, {transform_indices = @transform_3, window_bounds = array<i64: 1, 1, 1, 128>}, {transform_indices = @transform_4, window_bounds = array<i64: 1, 1, 1, 128>}]} {
    %c0_i32 = arith.constant 0 : i32
    %0 = arith.cmpi eq, %arg2, %c0_i32 : i32
    %1 = arith.extui %0 : i1 to i32
    %c0_i32_0 = arith.constant 0 : i32
    %2 = arith.cmpi ne, %1, %c0_i32_0 : i32
    scf.if %2 {
      %cst_38 = arith.constant 0.000000e+00 : f32
      %42 = vector.broadcast %cst_38 : f32 to vector<1x128xf32>
      %c0_39 = arith.constant 0 : index
      %c0_40 = arith.constant 0 : index
      %c0_41 = arith.constant 0 : index
      %c0_42 = arith.constant 0 : index
      %43 = vector.load %arg5[%c0_39, %c0_40, %c0_41, %c0_42] : memref<1x1x1x128xf32, #tpu.memory_space<vmem>>, vector<1x1x1x128xf32>
      %44 = vector.shape_cast %43 : vector<1x1x1x128xf32> to vector<1x128xf32>
      %45 = vector.shape_cast %42 : vector<1x128xf32> to vector<1x1x1x128xf32>
      tpu.vector_store %arg5[%c0_39, %c0_40, %c0_41, %c0_42], %45 {strides = array<i32>} : memref<1x1x1x128xf32, #tpu.memory_space<vmem>>, vector<1x1x1x128xf32>,
      %cst_43 = arith.constant 0.000000e+00 : f32
      %46 = vector.broadcast %cst_43 : f32 to vector<1x128xf32>
      %c0_44 = arith.constant 0 : index
      %c0_45 = arith.constant 0 : index
      %c0_46 = arith.constant 0 : index
      %c0_47 = arith.constant 0 : index
      %47 = vector.load %arg6[%c0_44, %c0_45, %c0_46, %c0_47] : memref<1x1x1x128xf32, #tpu.memory_space<vmem>>, vector<1x1x1x128xf32>
      %48 = vector.shape_cast %47 : vector<1x1x1x128xf32> to vector<1x128xf32>
      %49 = vector.shape_cast %46 : vector<1x128xf32> to vector<1x1x1x128xf32>
      tpu.vector_store %arg6[%c0_44, %c0_45, %c0_46, %c0_47], %49 {strides = array<i32>} : memref<1x1x1x128xf32, #tpu.memory_space<vmem>>, vector<1x1x1x128xf32>,
      %cst_48 = arith.constant 0.000000e+00 : f32
      %50 = vector.broadcast %cst_48 : f32 to vector<1x128xf32>
      %c0_49 = arith.constant 0 : index
      %c0_50 = arith.constant 0 : index
      %c0_51 = arith.constant 0 : index
      %c0_52 = arith.constant 0 : index
      %51 = vector.load %arg7[%c0_49, %c0_50, %c0_51, %c0_52] : memref<1x1x1x128xf32, #tpu.memory_space<vmem>>, vector<1x1x1x128xf32>
      %52 = vector.shape_cast %51 : vector<1x1x1x128xf32> to vector<1x128xf32>
      %53 = vector.shape_cast %50 : vector<1x128xf32> to vector<1x1x1x128xf32>
      tpu.vector_store %arg7[%c0_49, %c0_50, %c0_51, %c0_52], %53 {strides = array<i32>} : memref<1x1x1x128xf32, #tpu.memory_space<vmem>>, vector<1x1x1x128xf32>,
    } else {
    }
    %c0 = arith.constant 0 : index
    %c0_1 = arith.constant 0 : index
    %c0_2 = arith.constant 0 : index
    %c0_3 = arith.constant 0 : index
    %3 = vector.load %arg3[%c0, %c0_1, %c0_2, %c0_3] : memref<4x1x2x128xbf16, #tpu.memory_space<vmem>>, vector<4x1x2x128xbf16>
    %4 = vector.shape_cast %3 : vector<4x1x2x128xbf16> to vector<4x2x128xbf16>
    %5 = arith.extf %4 : vector<4x2x128xbf16> to vector<4x2x128xf32>
    %6 = arith.negf %5 : vector<4x2x128xf32>
    %7 = math.exp %6 : vector<4x2x128xf32>
    %cst = arith.constant 1.000000e+00 : f32
    %8 = vector.broadcast %cst : f32 to vector<4x2x128xf32>
    %9 = arith.addf %8, %7 : vector<4x2x128xf32>
    %10 = arith.divf %8, %9 : vector<4x2x128xf32>
    %c0_4 = arith.constant 0 : index
    %c0_5 = arith.constant 0 : index
    %c0_6 = arith.constant 0 : index
    %c0_7 = arith.constant 0 : index
    %11 = vector.load %arg4[%c0_4, %c0_5, %c0_6, %c0_7] : memref<4x1x2x128xbf16, #tpu.memory_space<vmem>>, vector<4x1x2x128xbf16>
    %12 = vector.shape_cast %11 : vector<4x1x2x128xbf16> to vector<4x2x128xbf16>
    %13 = arith.extf %12 : vector<4x2x128xbf16> to vector<4x2x128xf32>
    %c0_8 = arith.constant 0 : index
    %c0_9 = arith.constant 0 : index
    %c0_10 = arith.constant 0 : index
    %c0_11 = arith.constant 0 : index
    %14 = vector.load %arg5[%c0_8, %c0_9, %c0_10, %c0_11] : memref<1x1x1x128xf32, #tpu.memory_space<vmem>>, vector<1x1x1x128xf32>
    %15 = vector.shape_cast %14 : vector<1x1x1x128xf32> to vector<1x128xf32>
    %16 = arith.mulf %10, %13 : vector<4x2x128xf32>
    %cst_12 = arith.constant dense<0.000000e+00> : vector<2x128xf32>
    %17 = vector.multi_reduction <add>, %16, %cst_12 [0] : vector<4x2x128xf32> to vector<2x128xf32>
    %cst_13 = arith.constant dense<0.000000e+00> : vector<128xf32>
    %18 = vector.multi_reduction <add>, %17, %cst_13 [0] : vector<2x128xf32> to vector<128xf32>
    %19 = vector.shape_cast %18 : vector<128xf32> to vector<1x128xf32>
    %20 = arith.addf %15, %19 : vector<1x128xf32>
    %c0_14 = arith.constant 0 : index
    %c0_15 = arith.constant 0 : index
    %c0_16 = arith.constant 0 : index
    %c0_17 = arith.constant 0 : index
    %21 = vector.load %arg5[%c0_14, %c0_15, %c0_16, %c0_17] : memref<1x1x1x128xf32, #tpu.memory_space<vmem>>, vector<1x1x1x128xf32>
    %22 = vector.shape_cast %21 : vector<1x1x1x128xf32> to vector<1x128xf32>
    %23 = vector.shape_cast %20 : vector<1x128xf32> to vector<1x1x1x128xf32>
    tpu.vector_store %arg5[%c0_14, %c0_15, %c0_16, %c0_17], %23 {strides = array<i32>} : memref<1x1x1x128xf32, #tpu.memory_space<vmem>>, vector<1x1x1x128xf32>,
    %c0_18 = arith.constant 0 : index
    %c0_19 = arith.constant 0 : index
    %c0_20 = arith.constant 0 : index
    %c0_21 = arith.constant 0 : index
    %24 = vector.load %arg6[%c0_18, %c0_19, %c0_20, %c0_21] : memref<1x1x1x128xf32, #tpu.memory_space<vmem>>, vector<1x1x1x128xf32>
    %25 = vector.shape_cast %24 : vector<1x1x1x128xf32> to vector<1x128xf32>
    %cst_22 = arith.constant dense<0.000000e+00> : vector<2x128xf32>
    %26 = vector.multi_reduction <add>, %10, %cst_22 [0] : vector<4x2x128xf32> to vector<2x128xf32>
    %cst_23 = arith.constant dense<0.000000e+00> : vector<128xf32>
    %27 = vector.multi_reduction <add>, %26, %cst_23 [0] : vector<2x128xf32> to vector<128xf32>
    %28 = vector.shape_cast %27 : vector<128xf32> to vector<1x128xf32>
    %29 = arith.addf %25, %28 : vector<1x128xf32>
    %c0_24 = arith.constant 0 : index
    %c0_25 = arith.constant 0 : index
    %c0_26 = arith.constant 0 : index
    %c0_27 = arith.constant 0 : index
    %30 = vector.load %arg6[%c0_24, %c0_25, %c0_26, %c0_27] : memref<1x1x1x128xf32, #tpu.memory_space<vmem>>, vector<1x1x1x128xf32>
    %31 = vector.shape_cast %30 : vector<1x1x1x128xf32> to vector<1x128xf32>
    %32 = vector.shape_cast %29 : vector<1x128xf32> to vector<1x1x1x128xf32>
    tpu.vector_store %arg6[%c0_24, %c0_25, %c0_26, %c0_27], %32 {strides = array<i32>} : memref<1x1x1x128xf32, #tpu.memory_space<vmem>>, vector<1x1x1x128xf32>,
    %c0_28 = arith.constant 0 : index
    %c0_29 = arith.constant 0 : index
    %c0_30 = arith.constant 0 : index
    %c0_31 = arith.constant 0 : index
    %33 = vector.load %arg7[%c0_28, %c0_29, %c0_30, %c0_31] : memref<1x1x1x128xf32, #tpu.memory_space<vmem>>, vector<1x1x1x128xf32>
    %34 = vector.shape_cast %33 : vector<1x1x1x128xf32> to vector<1x128xf32>
    %cst_32 = arith.constant dense<0.000000e+00> : vector<2x128xf32>
    %35 = vector.multi_reduction <add>, %13, %cst_32 [0] : vector<4x2x128xf32> to vector<2x128xf32>
    %cst_33 = arith.constant dense<0.000000e+00> : vector<128xf32>
    %36 = vector.multi_reduction <add>, %35, %cst_33 [0] : vector<2x128xf32> to vector<128xf32>
    %37 = vector.shape_cast %36 : vector<128xf32> to vector<1x128xf32>
    %38 = arith.addf %34, %37 : vector<1x128xf32>
    %c0_34 = arith.constant 0 : index
    %c0_35 = arith.constant 0 : index
    %c0_36 = arith.constant 0 : index
    %c0_37 = arith.constant 0 : index
    %39 = vector.load %arg7[%c0_34, %c0_35, %c0_36, %c0_37] : memref<1x1x1x128xf32, #tpu.memory_space<vmem>>, vector<1x1x1x128xf32>
    %40 = vector.shape_cast %39 : vector<1x1x1x128xf32> to vector<1x128xf32>
    %41 = vector.shape_cast %38 : vector<1x128xf32> to vector<1x1x1x128xf32>
    tpu.vector_store %arg7[%c0_34, %c0_35, %c0_36, %c0_37], %41 {strides = array<i32>} : memref<1x1x1x128xf32, #tpu.memory_space<vmem>>, vector<1x1x1x128xf32>,
    return
  }
  func.func @transform_0(%arg0: i32, %arg1: i32, %arg2: i32) -> (i32, i32, i32, i32) {
    %c0_i32 = arith.constant 0 : i32
    %c0_i32_0 = arith.constant 0 : i32
    return %arg1, %arg0, %arg2, %c0_i32 : i32, i32, i32, i32
  }
  func.func @transform_1(%arg0: i32, %arg1: i32, %arg2: i32) -> (i32, i32, i32, i32) {
    %c0_i32 = arith.constant 0 : i32
    %c0_i32_0 = arith.constant 0 : i32
    return %arg1, %arg0, %arg2, %c0_i32 : i32, i32, i32, i32
  }
  func.func @transform_2(%arg0: i32, %arg1: i32, %arg2: i32) -> (i32, i32, i32, i32) {
    %c0_i32 = arith.constant 0 : i32
    %c0_i32_0 = arith.constant 0 : i32
    %c0_i32_1 = arith.constant 0 : i32
    return %arg0, %arg1, %c0_i32, %c0_i32_0 : i32, i32, i32, i32
  }
  func.func @transform_3(%arg0: i32, %arg1: i32, %arg2: i32) -> (i32, i32, i32, i32) {
    %c0_i32 = arith.constant 0 : i32
    %c0_i32_0 = arith.constant 0 : i32
    %c0_i32_1 = arith.constant 0 : i32
    return %arg0, %arg1, %c0_i32, %c0_i32_0 : i32, i32, i32, i32
  }
  func.func @transform_4(%arg0: i32, %arg1: i32, %arg2: i32) -> (i32, i32, i32, i32) {
    %c0_i32 = arith.constant 0 : i32
    %c0_i32_0 = arith.constant 0 : i32
    %c0_i32_1 = arith.constant 0 : i32
    return %arg0, %arg1, %c0_i32, %c0_i32_0 : i32, i32, i32, i32
  }
}

</mosaic_0001>

<llo_original>
// kernel: custom_loss.1
$region0: #{custom_loss.1}
  #allocation0 [shape = 'u32[]', space=smem, size = 0x4, offset = 0x4, fixed_abs, tag = 'smem constant byte address 0x4 - core index']
  #allocation1 [shape = 'u32[144,128]{1,0:T(1,128)}', space=vmem, size = 0x12000, scoped, tag = 'internal scratch']
  %s0 = inlined_call_operand.vmem [shape: bf16[4,3,2,128], index: 0, kind: input, shape index: {}]
  %s1 = inlined_call_operand.vmem [shape: bf16[4,3,2,128], index: 1, kind: input, shape index: {}]
  %s2 = inlined_call_operand.vmem [shape: f32[3,1,1,128], index: 2, kind: output, shape index: {0}]
  %s3 = inlined_call_operand.vmem [shape: f32[3,1,1,128], index: 3, kind: output, shape index: {1}]
  %s4 = inlined_call_operand.vmem [shape: f32[3,1,1,128], index: 4, kind: output, shape index: {2}]
  %5 = xla_tuple %s2, %s3, %s4
  %s6 = sld [smem:[#allocation0]]
  $region129: #{custom_loss.1} parent=0
    _
  %s8 = ssub.s32 1, %s6
  %s9 = scalar_select 0, %s8, %s6
  $region1: #{custom_loss.1} parent=0
    #allocation2 [shape = 'u8[4096]{0}', space=vmem, size = 0x1000, scoped, tag = 'input window, operand 0']
    #allocation3 [shape = 'u8[4096]{0}', space=vmem, size = 0x1000, scoped, tag = 'input window, operand 1']
    loop: start=0, step=1, limit=5
    $region2: #{custom_loss.1} parent=1 // loop_pre_header
      _
    $region3: #{custom_loss.1} parent=1 // loop_header
      %s11 = sphi 0, %s15
      %p12 = scmp.ge.s32.totalorder %s11, 5
      %s18 = sphi 0, %s37
      %s19 = sphi 0, %s33
      %s20 = sphi 0, %s29
      %s21 = sphi 0, %s18
      %s22 = sphi 0, %s19
      %s23 = sphi 0, %s20
      %s24 = sphi 0, %s21
      %s25 = sphi 0, %s22
      %s26 = sphi 0, %s23
      %s44 = sphi 0, %s46
      %s47 = sphi 0, %s44
      %s48 = sphi 0, %s47
      %s64 = sphi 0, %s48
      %s74 = sphi 0, %s76
      %s77 = sphi 0, %s74
      %s78 = sphi 0, %s77
      %s94 = sphi 0, %s78
      %s102 = sphi 0, %s104
      %s105 = sphi 0, %s102
      %s106 = sphi 0, %s105
      %s122 = sphi 0, %s106
      %s130 = sphi 0, %s132
      %s133 = sphi 0, %s130
      %s134 = sphi 0, %s133
      %s150 = sphi 0, %s134
      %s158 = sphi 0, %s160
      %s161 = sphi 0, %s158
      %s162 = sphi 0, %s161
      %s178 = sphi 0, %s162
    $region4: #{custom_loss.1} parent=1 // loop_header_branch
      %14 = sbr.rel (%p12) target = $region8
    $region5: #{custom_loss.1} parent=1 // loop_body
      %s16 = ssub.s32 %s11, 1
      %s17 = ssub.s32 %s11, 2
      %s27 = sadd.s32 1, %s20
      %p28 = scmp.ge.s32.totalorder %s27, 1
      %s29 = scalar_select %p28, 0, %s27
      %s30 = sadd.s32 1, %s19
      %s31 = scalar_select %p28, %s30, %s19
      %p32 = scmp.ge.s32.totalorder %s31, 1
      %s33 = scalar_select %p32, 0, %s31
      %s34 = sadd.s32 1, %s18
      %s35 = scalar_select %p32, %s34, %s18
      %p36 = scmp.ge.s32.totalorder %s35, 3
      %s37 = scalar_select %p36, 0, %s35
      %s38 = ssub.s32 %s19, %s33
      %s39 = ssub.s32 %s18, %s37
      %s40 = sor.u32 %s38, %s39
      %s41 = ssub.s32 %s20, %s29
      %s42 = sor.u32 %s40, %s41
      %p43 = scmp.eq.s32.totalorder %s42, 0
      %s45 = sadd.s32 %s44, 1
      %s46 = scalar_select %p43, %s44, %s45
      %p49 = pneg %p43
      %p50 = scmp.eq.s32.totalorder %s11, 2
      %p51 = por %p49, %p50
      %p52 = scmp.ne.s32.totalorder %s44, %s47
      %p53 = scmp.eq.s32.totalorder %s11, 0
      %p54 = por %p52, %p53
      %p55 = scmp.ne.s32.totalorder %s44, %s47
      %p56 = scmp.eq.s32.totalorder %s16, 2
      %p57 = por %p55, %p56
      %p58 = scmp.ne.s32.totalorder %s47, %s48
      %p59 = scmp.eq.s32.totalorder %s16, 0
      %p60 = por %p58, %p59
      %p61 = scmp.ne.s32.totalorder %s47, %s48
      %p62 = scmp.eq.s32.totalorder %s17, 2
      %p63 = por %p61, %p62
      %p65 = scmp.ne.s32.totalorder %s48, %s64
      %p66 = scmp.eq.s32.totalorder %s17, 0
      %p67 = por %p65, %p66
      %s68 = ssub.s32 %s19, %s33
      %s69 = ssub.s32 %s18, %s37
      %s70 = sor.u32 %s68, %s69
      %s71 = ssub.s32 %s20, %s29
      %s72 = sor.u32 %s70, %s71
      %p73 = scmp.eq.s32.totalorder %s72, 0
      %s75 = sadd.s32 %s74, 1
      %s76 = scalar_select %p73, %s74, %s75
      %p79 = pneg %p73
      %p80 = scmp.eq.s32.totalorder %s11, 2
      %p81 = por %p79, %p80
      %p82 = scmp.ne.s32.totalorder %s74, %s77
      %p83 = scmp.eq.s32.totalorder %s11, 0
      %p84 = por %p82, %p83
      %p85 = scmp.ne.s32.totalorder %s74, %s77
      %p86 = scmp.eq.s32.totalorder %s16, 2
      %p87 = por %p85, %p86
      %p88 = scmp.ne.s32.totalorder %s77, %s78
      %p89 = scmp.eq.s32.totalorder %s16, 0
      %p90 = por %p88, %p89
      %p91 = scmp.ne.s32.totalorder %s77, %s78
      %p92 = scmp.eq.s32.totalorder %s17, 2
      %p93 = por %p91, %p92
      %p95 = scmp.ne.s32.totalorder %s78, %s94
      %p96 = scmp.eq.s32.totalorder %s17, 0
      %p97 = por %p95, %p96
      %s98 = ssub.s32 %s18, %s37
      %s99 = ssub.s32 %s19, %s33
      %s100 = sor.u32 %s98, %s99
      %p101 = scmp.eq.s32.totalorder %s100, 0
      %s103 = sadd.s32 %s102, 1
      %s104 = scalar_select %p101, %s102, %s103
      %p107 = pneg %p101
      %p108 = scmp.eq.s32.totalorder %s11, 2
      %p109 = por %p107, %p108
      %p110 = scmp.ne.s32.totalorder %s102, %s105
      %p111 = scmp.eq.s32.totalorder %s11, 0
      %p112 = por %p110, %p111
      %p113 = scmp.ne.s32.totalorder %s102, %s105
      %p114 = scmp.eq.s32.totalorder %s16, 2
      %p115 = por %p113, %p114
      %p116 = scmp.ne.s32.totalorder %s105, %s106
      %p117 = scmp.eq.s32.totalorder %s16, 0
      %p118 = por %p116, %p117
      %p119 = scmp.ne.s32.totalorder %s105, %s106
      %p120 = scmp.eq.s32.totalorder %s17, 2
      %p121 = por %p119, %p120
      %p123 = scmp.ne.s32.totalorder %s106, %s122
      %p124 = scmp.eq.s32.totalorder %s17, 0
      %p125 = por %p123, %p124
      %s126 = ssub.s32 %s18, %s37
      %s127 = ssub.s32 %s19, %s33
      %s128 = sor.u32 %s126, %s127
      %p129 = scmp.eq.s32.totalorder %s128, 0
      %s131 = sadd.s32 %s130, 1
      %s132 = scalar_select %p129, %s130, %s131
      %p135 = pneg %p129
      %p136 = scmp.eq.s32.totalorder %s11, 2
      %p137 = por %p135, %p136
      %p138 = scmp.ne.s32.totalorder %s130, %s133
      %p139 = scmp.eq.s32.totalorder %s11, 0
      %p140 = por %p138, %p139
      %p141 = scmp.ne.s32.totalorder %s130, %s133
      %p142 = scmp.eq.s32.totalorder %s16, 2
      %p143 = por %p141, %p142
      %p144 = scmp.ne.s32.totalorder %s133, %s134
      %p145 = scmp.eq.s32.totalorder %s16, 0
      %p146 = por %p144, %p145
      %p147 = scmp.ne.s32.totalorder %s133, %s134
      %p148 = scmp.eq.s32.totalorder %s17, 2
      %p149 = por %p147, %p148
      %p151 = scmp.ne.s32.totalorder %s134, %s150
      %p152 = scmp.eq.s32.totalorder %s17, 0
      %p153 = por %p151, %p152
      %s154 = ssub.s32 %s18, %s37
      %s155 = ssub.s32 %s19, %s33
      %s156 = sor.u32 %s154, %s155
      %p157 = scmp.eq.s32.totalorder %s156, 0
      %s159 = sadd.s32 %s158, 1
      %s160 = scalar_select %p157, %s158, %s159
      %p163 = pneg %p157
      %p164 = scmp.eq.s32.totalorder %s11, 2
      %p165 = por %p163, %p164
      %p166 = scmp.ne.s32.totalorder %s158, %s161
      %p167 = scmp.eq.s32.totalorder %s11, 0
      %p168 = por %p166, %p167
      %p169 = scmp.ne.s32.totalorder %s158, %s161
      %p170 = scmp.eq.s32.totalorder %s16, 2
      %p171 = por %p169, %p170
      %p172 = scmp.ne.s32.totalorder %s161, %s162
      %p173 = scmp.eq.s32.totalorder %s16, 0
      %p174 = por %p172, %p173
      %p175 = scmp.ne.s32.totalorder %s161, %s162
      %p176 = scmp.eq.s32.totalorder %s17, 2
      %p177 = por %p175, %p176
      %p179 = scmp.ne.s32.totalorder %s162, %s178
      %p180 = scmp.eq.s32.totalorder %s17, 0
      %p181 = por %p179, %p180
      %p182 = scmp.le.s32.totalorder 1, %s11
      %p183 = scmp.lt.s32.totalorder %s11, 4
      %p184 = pnand %p182, %p183
      %p185 = pneg %p184
      // Predicated region
      $region9: #{custom_loss.1} parent=5 // pred_check
        _
      $region10: #{custom_loss.1} parent=5 // pred_check_branch
        %187 = sbr.rel (%p184) target = $region12
      $region11: #{custom_loss.1} parent=5 // pred_region
        %s188 = ssub.s32 %s11, 1
      $region12: #{custom_loss.1} parent=5 // pred_fallthru
        _
      %p189 = scmp.lt.s32.totalorder %s11, 3
      // Predicated region
      $region13: #{custom_loss.1} parent=5 // pred_check
        %p190 = pneg %p189
      $region14: #{custom_loss.1} parent=5 // pred_check_branch
        %192 = sbr.rel (%p190) target = $region16
      $region15: #{custom_loss.1} parent=5 // pred_region
        // Predicated region
        $region17: #{custom_loss.1} parent=15 // pred_check
          %p193 = pneg %p54
        $region18: #{custom_loss.1} parent=15 // pred_check_branch
          %195 = sbr.rel (%p193) target = $region20
        $region19: #{custom_loss.1} parent=15 // pred_region
          %s196 = sand.u32 %s44, 1
          %s197 = sand.u32 %s44, 1
          %s198 = smul.addr %s197, 4
          %s199 = scalar_lea.vmem [#allocation2], %s198
          %s200 = smul.u32 4, %s19
          %s201 = sadd.s32 %s20, %s18
          %s202 = smul.addr %s200, 3
          %s203 = sadd.s32 %s201, %s202
          %s204 = scalar_lea.vmem %s0, %s203
          // Predicated region
          $region21: #{custom_loss.1} parent=19 // pred_check
            _
          $region22: #{custom_loss.1} parent=19 // pred_check_branch
            %206 = sbr.rel (0) target = $region24
          $region23: #{custom_loss.1} parent=19 // pred_region
            // Predicated region
            $region25: #{custom_loss.1} parent=23 // pred_check
              _
            $region26: #{custom_loss.1} parent=23 // pred_check_branch
              %208 = sbr.rel target = $region28
            $region27: #{custom_loss.1} parent=23 // pred_region
              // Predicated region
              $region40: #{custom_loss.1} parent=27 // pred_check
                _
              $region41: #{custom_loss.1} parent=27 // pred_check_branch
                %230 = sbr.rel (0) target = $region43
              $region42: #{custom_loss.1} parent=27 // pred_region
                %s232 = ssub.s32 2, 1
                loop: start=0, step=1, limit=1
                $region44: #{custom_loss.1} parent=42 // loop_pre_header
                  _
                $region45: #{custom_loss.1} parent=42 // loop_header
                  %s234 = sphi 0, %s238
                  %p235 = scmp.ge.s32.totalorder %s234, 1
                  %s239 = sphi %s204, %s204
                  %s240 = sphi %s199, %s199
                $region46: #{custom_loss.1} parent=42 // loop_header_branch
                  %237 = sbr.rel (%p235) target = $region50
                $region47: #{custom_loss.1} parent=42 // loop_body
                  %v241 = vld [vmem:[%s239] sm:%s232]
                  %242 = vst [vmem:[%s240] sm:%s232] %v241
                  %v243 = vld [vmem:[%s239 + $0x3] sm:%s232]
                  %244 = vst [vmem:[%s240 + $0x1] sm:%s232] %v243
                  %v245 = vld [vmem:[%s239 + $0x6] sm:%s232]
                  %246 = vst [vmem:[%s240 + $0x2] sm:%s232] %v245
                  %v247 = vld [vmem:[%s239 + $0x9] sm:%s232]
                  %248 = vst [vmem:[%s240 + $0x3] sm:%s232] %v247
                $region48: #{custom_loss.1} parent=42 // loop_footer
                  %s238 = sadd.s32 1, %s234
                $region49: #{custom_loss.1} parent=42 // loop_footer_branch
                  %233 = sbr.rel target = $region45
                $region50: #{custom_loss.1} parent=42 // loop_exit
                  _
              $region43: #{custom_loss.1} parent=27 // pred_fallthru
                _
            $region28: #{custom_loss.1} parent=23 // pred_fallthru
              _
            // Predicated region
            $region29: #{custom_loss.1} parent=23 // pred_check
              _
            $region30: #{custom_loss.1} parent=23 // pred_check_branch
              %210 = sbr.rel (0) target = $region32
            $region31: #{custom_loss.1} parent=23 // pred_region
              %s212 = ssub.s32 2, 1
              loop: start=0, step=1, limit=1
              $region33: #{custom_loss.1} parent=31 // loop_pre_header
                _
              $region34: #{custom_loss.1} parent=31 // loop_header
                %s214 = sphi 0, %s218
                %p215 = scmp.ge.s32.totalorder %s214, 1
                %s219 = sphi %s204, %s204
                %s220 = sphi %s199, %s199
              $region35: #{custom_loss.1} parent=31 // loop_header_branch
                %217 = sbr.rel (%p215) target = $region39
              $region36: #{custom_loss.1} parent=31 // loop_body
                %v221 = vld [vmem:[%s219] sm:%s212]
                %222 = vst [vmem:[%s220] sm:%s212] %v221
                %v223 = vld [vmem:[%s219 + $0x3] sm:%s212]
                %224 = vst [vmem:[%s220 + $0x1] sm:%s212] %v223
                %v225 = vld [vmem:[%s219 + $0x6] sm:%s212]
                %226 = vst [vmem:[%s220 + $0x2] sm:%s212] %v225
                %v227 = vld [vmem:[%s219 + $0x9] sm:%s212]
                %228 = vst [vmem:[%s220 + $0x3] sm:%s212] %v227
              $region37: #{custom_loss.1} parent=31 // loop_footer
                %s218 = sadd.s32 1, %s214
              $region38: #{custom_loss.1} parent=31 // loop_footer_branch
                %213 = sbr.rel target = $region34
              $region39: #{custom_loss.1} parent=31 // loop_exit
                _
            $region32: #{custom_loss.1} parent=23 // pred_fallthru
              _
          $region24: #{custom_loss.1} parent=19 // pred_fallthru
            _
          %249 = vnop
        $region20: #{custom_loss.1} parent=15 // pred_fallthru
          _
        // Predicated region
        $region51: #{custom_loss.1} parent=15 // pred_check
          %p250 = pneg %p84
        $region52: #{custom_loss.1} parent=15 // pred_check_branch
          %252 = sbr.rel (%p250) target = $region54
        $region53: #{custom_loss.1} parent=15 // pred_region
          %s253 = sand.u32 %s74, 1
          %s254 = sand.u32 %s74, 1
          %s255 = smul.addr %s254, 4
          %s256 = scalar_lea.vmem [#allocation3], %s255
          %s257 = smul.u32 4, %s19
          %s258 = sadd.s32 %s20, %s18
          %s259 = smul.addr %s257, 3
          %s260 = sadd.s32 %s258, %s259
          %s261 = scalar_lea.vmem %s1, %s260
          // Predicated region
          $region55: #{custom_loss.1} parent=53 // pred_check
            _
          $region56: #{custom_loss.1} parent=53 // pred_check_branch
            %263 = sbr.rel (0) target = $region58
          $region57: #{custom_loss.1} parent=53 // pred_region
            // Predicated region
            $region59: #{custom_loss.1} parent=57 // pred_check
              _
            $region60: #{custom_loss.1} parent=57 // pred_check_branch
              %265 = sbr.rel target = $region62
            $region61: #{custom_loss.1} parent=57 // pred_region
              // Predicated region
              $region74: #{custom_loss.1} parent=61 // pred_check
                _
              $region75: #{custom_loss.1} parent=61 // pred_check_branch
                %287 = sbr.rel (0) target = $region77
              $region76: #{custom_loss.1} parent=61 // pred_region
                %s289 = ssub.s32 2, 1
                loop: start=0, step=1, limit=1
                $region78: #{custom_loss.1} parent=76 // loop_pre_header
                  _
                $region79: #{custom_loss.1} parent=76 // loop_header
                  %s291 = sphi 0, %s295
                  %p292 = scmp.ge.s32.totalorder %s291, 1
                  %s296 = sphi %s261, %s261
                  %s297 = sphi %s256, %s256
                $region80: #{custom_loss.1} parent=76 // loop_header_branch
                  %294 = sbr.rel (%p292) target = $region84
                $region81: #{custom_loss.1} parent=76 // loop_body
                  %v298 = vld [vmem:[%s296] sm:%s289]
                  %299 = vst [vmem:[%s297] sm:%s289] %v298
                  %v300 = vld [vmem:[%s296 + $0x3] sm:%s289]
                  %301 = vst [vmem:[%s297 + $0x1] sm:%s289] %v300
                  %v302 = vld [vmem:[%s296 + $0x6] sm:%s289]
                  %303 = vst [vmem:[%s297 + $0x2] sm:%s289] %v302
                  %v304 = vld [vmem:[%s296 + $0x9] sm:%s289]
                  %305 = vst [vmem:[%s297 + $0x3] sm:%s289] %v304
                $region82: #{custom_loss.1} parent=76 // loop_footer
                  %s295 = sadd.s32 1, %s291
                $region83: #{custom_loss.1} parent=76 // loop_footer_branch
                  %290 = sbr.rel target = $region79
                $region84: #{custom_loss.1} parent=76 // loop_exit
                  _
              $region77: #{custom_loss.1} parent=61 // pred_fallthru
                _
            $region62: #{custom_loss.1} parent=57 // pred_fallthru
              _
            // Predicated region
            $region63: #{custom_loss.1} parent=57 // pred_check
              _
            $region64: #{custom_loss.1} parent=57 // pred_check_branch
              %267 = sbr.rel (0) target = $region66
            $region65: #{custom_loss.1} parent=57 // pred_region
              %s269 = ssub.s32 2, 1
              loop: start=0, step=1, limit=1
              $region67: #{custom_loss.1} parent=65 // loop_pre_header
                _
              $region68: #{custom_loss.1} parent=65 // loop_header
                %s271 = sphi 0, %s275
                %p272 = scmp.ge.s32.totalorder %s271, 1
                %s276 = sphi %s261, %s261
                %s277 = sphi %s256, %s256
              $region69: #{custom_loss.1} parent=65 // loop_header_branch
                %274 = sbr.rel (%p272) target = $region73
              $region70: #{custom_loss.1} parent=65 // loop_body
                %v278 = vld [vmem:[%s276] sm:%s269]
                %279 = vst [vmem:[%s277] sm:%s269] %v278
                %v280 = vld [vmem:[%s276 + $0x3] sm:%s269]
                %281 = vst [vmem:[%s277 + $0x1] sm:%s269] %v280
                %v282 = vld [vmem:[%s276 + $0x6] sm:%s269]
                %283 = vst [vmem:[%s277 + $0x2] sm:%s269] %v282
                %v284 = vld [vmem:[%s276 + $0x9] sm:%s269]
                %285 = vst [vmem:[%s277 + $0x3] sm:%s269] %v284
              $region71: #{custom_loss.1} parent=65 // loop_footer
                %s275 = sadd.s32 1, %s271
              $region72: #{custom_loss.1} parent=65 // loop_footer_branch
                %270 = sbr.rel target = $region68
              $region73: #{custom_loss.1} parent=65 // loop_exit
                _
            $region66: #{custom_loss.1} parent=57 // pred_fallthru
              _
          $region58: #{custom_loss.1} parent=53 // pred_fallthru
            _
          %306 = vnop
        $region54: #{custom_loss.1} parent=15 // pred_fallthru
          _
      $region16: #{custom_loss.1} parent=5 // pred_fallthru
        _
      %p307 = scmp.le.s32.totalorder 1, %s11
      %p308 = scmp.lt.s32.totalorder %s11, 4
      %p309 = pnand %p307, %p308
      %p310 = pneg %p309
      // Predicated region
      $region85: #{custom_loss.1} parent=5 // pred_check
        _
      $region86: #{custom_loss.1} parent=5 // pred_check_branch
        %312 = sbr.rel (%p309) target = $region88
      $region87: #{custom_loss.1} parent=5 // pred_region
        %s313 = ssub.s32 %s11, 1
        %s314 = sand.u32 %s47, 1
        %s315 = sand.u32 %s47, 1
        %s316 = smul.addr %s315, 4
        %s317 = scalar_lea.vmem [#allocation2], %s316
        // Predicated region
        $region89: #{custom_loss.1} parent=87 // pred_check
          %p318 = pneg %p60
        $region90: #{custom_loss.1} parent=87 // pred_check_branch
          %320 = sbr.rel (%p318) target = $region92
        $region91: #{custom_loss.1} parent=87 // pred_region
          _
        $region92: #{custom_loss.1} parent=87 // pred_fallthru
          _
        %s321 = sand.u32 %s77, 1
        %s322 = sand.u32 %s77, 1
        %s323 = smul.addr %s322, 4
        %s324 = scalar_lea.vmem [#allocation3], %s323
        // Predicated region
        $region93: #{custom_loss.1} parent=87 // pred_check
          %p325 = pneg %p90
        $region94: #{custom_loss.1} parent=87 // pred_check_branch
          %327 = sbr.rel (%p325) target = $region96
        $region95: #{custom_loss.1} parent=87 // pred_region
          _
        $region96: #{custom_loss.1} parent=87 // pred_fallthru
          _
        %s328 = sand.u32 %s47, 1
        %s329 = sand.u32 %s47, 1
        %s330 = smul.addr %s329, 4
        %s331 = scalar_lea.vmem [#allocation2], %s330
        %p332 = pneg %p60
        %p333 = pneg %p57
        %s334 = sand.u32 %s77, 1
        %s335 = sand.u32 %s77, 1
        %s336 = smul.addr %s335, 4
        %s337 = scalar_lea.vmem [#allocation3], %s336
        %p338 = pneg %p90
        %p339 = pneg %p87
        %p340 = pneg %p118
        %p341 = pneg %p115
        %p342 = scmp.lt.s32.totalorder %s21, 2
        %s343 = scalar_select %p342, %s21, 2
        %p344 = scmp.lt.s32.totalorder %s22, 0
        %s345 = scalar_select %p344, %s22, 0
        %s346 = sadd.s32 %s345, %s343
        %s347 = scalar_lea.vmem %s2, %s346
        %p348 = pneg %p146
        %p349 = pneg %p143
        %p350 = scmp.lt.s32.totalorder %s21, 2
        %s351 = scalar_select %p350, %s21, 2
        %p352 = scmp.lt.s32.totalorder %s22, 0
        %s353 = scalar_select %p352, %s22, 0
        %s354 = sadd.s32 %s353, %s351
        %s355 = scalar_lea.vmem %s3, %s354
        %p356 = pneg %p174
        %p357 = pneg %p171
        %p358 = scmp.lt.s32.totalorder %s21, 2
        %s359 = scalar_select %p358, %s21, 2
        %p360 = scmp.lt.s32.totalorder %s22, 0
        %s361 = scalar_select %p360, %s22, 0
        %s362 = sadd.s32 %s361, %s359
        %s363 = scalar_lea.vmem %s4, %s362
        %s364 = smul.u32 4, %s22
        %s365 = smul.u32 4, %s22
        %p366 = scmp.lt.s32.totalorder %s21, 2
        %s367 = scalar_select %p366, %s21, 2
        %p368 = scmp.lt.s32.totalorder %s22, 0
        %s369 = scalar_select %p368, %s22, 0
        %s370 = sadd.s32 %s369, %s367
        %s371 = scalar_lea.vmem %s2, %s370
        %p372 = scmp.lt.s32.totalorder %s21, 2
        %s373 = scalar_select %p372, %s21, 2
        %p374 = scmp.lt.s32.totalorder %s22, 0
        %s375 = scalar_select %p374, %s22, 0
        %s376 = sadd.s32 %s375, %s373
        %s377 = scalar_lea.vmem %s3, %s376
        %p378 = scmp.lt.s32.totalorder %s21, 2
        %s379 = scalar_select %p378, %s21, 2
        %p380 = scmp.lt.s32.totalorder %s22, 0
        %s381 = scalar_select %p380, %s22, 0
        %s382 = sadd.s32 %s381, %s379
        %s383 = scalar_lea.vmem %s4, %s382
        %p384 = scmp.eq.s32.totalorder %s23, 0
        // Predicated region
        $region97: #{custom_loss.1} parent=87 // pred_check
          %p385 = pneg %p384
        $region98: #{custom_loss.1} parent=87 // pred_check_branch
          %387 = sbr.rel (%p385) target = $region100
        $region99: #{custom_loss.1} parent=87 // pred_region
          %388 = vst [vmem:[%s371] sm:$0x1] 0.0
          %389 = vst [vmem:[%s377] sm:$0x1] 0.0
          %390 = vst [vmem:[%s383] sm:$0x1] 0.0
        $region100: #{custom_loss.1} parent=87 // pred_fallthru
          _
        %v391 = vld [vmem:[%s317] sm:$0x1]
        %v392 = vld [vmem:[%s317 + $0x1] sm:$0x1]
        %v393 = vld [vmem:[%s317 + $0x2] sm:$0x1]
        %v394 = vld [vmem:[%s317 + $0x3] sm:$0x1]
        %v395 = vunpack.c.l.bf16 %v391
        %v396 = vunpack.c.l.bf16 %v392
        %v397 = vunpack.c.l.bf16 %v393
        %v398 = vunpack.c.l.bf16 %v394
        %v399 = vxor.u32 %v395, 2147483648
        %v400 = vxor.u32 %v396, 2147483648
        %v401 = vxor.u32 %v397, 2147483648
        %v402 = vxor.u32 %v398, 2147483648
        %v403 = vmul.f32 %v399, 1.442695
        %v404 = vpow.pop %v403
        %v405 = vmul.f32 %v400, 1.442695
        %v406 = vpow.pop %v405
        %v407 = vmul.f32 %v401, 1.442695
        %v408 = vpow.pop %v407
        %v409 = vmul.f32 %v402, 1.442695
        %v410 = vpow.pop %v409
        %v411 = vadd.f32 %v404, 1.0
        %v412 = vadd.f32 %v406, 1.0
        %v413 = vadd.f32 %v408, 1.0
        %v414 = vadd.f32 %v410, 1.0
        %v415 = vrcp.pop %v411
        %v416 = vmul.f32 1.0, %v415
        %v417 = vrcp.pop %v412
        %v418 = vmul.f32 1.0, %v417
        %v419 = vrcp.pop %v413
        %v420 = vmul.f32 1.0, %v419
        %v421 = vrcp.pop %v414
        %v422 = vmul.f32 1.0, %v421
        %v423 = vld [vmem:[%s324] sm:$0x1]
        %v424 = vld [vmem:[%s324 + $0x1] sm:$0x1]
        %v425 = vld [vmem:[%s324 + $0x2] sm:$0x1]
        %v426 = vld [vmem:[%s324 + $0x3] sm:$0x1]
        %v427 = vunpack.c.l.bf16 %v423
        %v428 = vunpack.c.l.bf16 %v424
        %v429 = vunpack.c.l.bf16 %v425
        %v430 = vunpack.c.l.bf16 %v426
        %v431 = vld [vmem:[%s371] sm:$0x1]
        %v432 = vmul.f32 %v416, %v427
        %v433 = vmul.f32 %v418, %v428
        %v434 = vmul.f32 %v420, %v429
        %v435 = vmul.f32 %v422, %v430
        %vm436 = vcmask 1041408
        %v437 = vsel %vm436, %v432, 0.0
        %v438 = vsel %vm436, %v433, 0.0
        %v439 = vadd.f32 %v437, %v438
        %v440 = vsel %vm436, %v434, 0.0
        %v441 = vadd.f32 %v439, %v440
        %v442 = vsel %vm436, %v435, 0.0
        %v443 = vadd.f32 %v441, %v442
        %v444 = vsel %vm436, %v443, 0.0
        %v445 = vrot.slane %v444, 4
        %v446 = vadd.f32 %v444, %v445
        %v447 = vrot.slane %v446, 2
        %v448 = vadd.f32 %v446, %v447
        %v449 = vrot.slane %v448, 1
        %v450 = vadd.f32 %v448, %v449
        %v451 = vadd.f32 %v431, %v450
        %452 = vst [vmem:[%s371] sm:$0x1] %v451
        %v453 = vld [vmem:[%s377] sm:$0x1]
        %v454 = vsel %vm436, %v416, 0.0
        %v455 = vsel %vm436, %v418, 0.0
        %v456 = vadd.f32 %v454, %v455
        %v457 = vsel %vm436, %v420, 0.0
        %v458 = vadd.f32 %v456, %v457
        %v459 = vsel %vm436, %v422, 0.0
        %v460 = vadd.f32 %v458, %v459
        %v461 = vsel %vm436, %v460, 0.0
        %v462 = vrot.slane %v461, 4
        %v463 = vadd.f32 %v461, %v462
        %v464 = vrot.slane %v463, 2
        %v465 = vadd.f32 %v463, %v464
        %v466 = vrot.slane %v465, 1
        %v467 = vadd.f32 %v465, %v466
        %v468 = vadd.f32 %v453, %v467
        %469 = vst [vmem:[%s377] sm:$0x1] %v468
        %v470 = vld [vmem:[%s383] sm:$0x1]
        %v471 = vsel %vm436, %v427, 0.0
        %v472 = vsel %vm436, %v428, 0.0
        %v473 = vadd.f32 %v471, %v472
        %v474 = vsel %vm436, %v429, 0.0
        %v475 = vadd.f32 %v473, %v474
        %v476 = vsel %vm436, %v430, 0.0
        %v477 = vadd.f32 %v475, %v476
        %v478 = vsel %vm436, %v477, 0.0
        %v479 = vrot.slane %v478, 4
        %v480 = vadd.f32 %v478, %v479
        %v481 = vrot.slane %v480, 2
        %v482 = vadd.f32 %v480, %v481
        %v483 = vrot.slane %v482, 1
        %v484 = vadd.f32 %v482, %v483
        %v485 = vadd.f32 %v470, %v484
        %486 = vst [vmem:[%s383] sm:$0x1] %v485
        %p487 = scmp.lt.s32.totalorder %s21, 2
        %s488 = scalar_select %p487, %s21, 2
        %p489 = scmp.lt.s32.totalorder %s22, 0
        %s490 = scalar_select %p489, %s22, 0
        %s491 = sadd.s32 %s490, %s488
        %s492 = scalar_lea.vmem %s2, %s491
        %p493 = scmp.lt.s32.totalorder %s21, 2
        %s494 = scalar_select %p493, %s21, 2
        %p495 = scmp.lt.s32.totalorder %s22, 0
        %s496 = scalar_select %p495, %s22, 0
        %s497 = sadd.s32 %s496, %s494
        %s498 = scalar_lea.vmem %s3, %s497
        %p499 = scmp.lt.s32.totalorder %s21, 2
        %s500 = scalar_select %p499, %s21, 2
        %p501 = scmp.lt.s32.totalorder %s22, 0
        %s502 = scalar_select %p501, %s22, 0
        %s503 = sadd.s32 %s502, %s500
        %s504 = scalar_lea.vmem %s4, %s503
        // Predicated region
        $region101: #{custom_loss.1} parent=87 // pred_check
          %p505 = pneg %p115
        $region102: #{custom_loss.1} parent=87 // pred_check_branch
          %507 = sbr.rel (%p505) target = $region104
        $region103: #{custom_loss.1} parent=87 // pred_region
          _
        $region104: #{custom_loss.1} parent=87 // pred_fallthru
          _
        // Predicated region
        $region105: #{custom_loss.1} parent=87 // pred_check
          %p508 = pneg %p143
        $region106: #{custom_loss.1} parent=87 // pred_check_branch
          %510 = sbr.rel (%p508) target = $region108
        $region107: #{custom_loss.1} parent=87 // pred_region
          _
        $region108: #{custom_loss.1} parent=87 // pred_fallthru
          _
        // Predicated region
        $region109: #{custom_loss.1} parent=87 // pred_check
          %p511 = pneg %p171
        $region110: #{custom_loss.1} parent=87 // pred_check_branch
          %513 = sbr.rel (%p511) target = $region112
        $region111: #{custom_loss.1} parent=87 // pred_region
          _
        $region112: #{custom_loss.1} parent=87 // pred_fallthru
          _
      $region88: #{custom_loss.1} parent=5 // pred_fallthru
        _
      %p514 = scmp.le.s32.totalorder 2, %s11
      // Predicated region
      $region113: #{custom_loss.1} parent=5 // pred_check
        %p515 = pneg %p514
      $region114: #{custom_loss.1} parent=5 // pred_check_branch
        %517 = sbr.rel (%p515) target = $region116
      $region115: #{custom_loss.1} parent=5 // pred_region
        %s518 = ssub.s32 %s11, 2
        // Predicated region
        $region117: #{custom_loss.1} parent=115 // pred_check
          %p519 = pneg %p121
        $region118: #{custom_loss.1} parent=115 // pred_check_branch
          %521 = sbr.rel (%p519) target = $region120
        $region119: #{custom_loss.1} parent=115 // pred_region
          %p522 = scmp.lt.s32.totalorder %s24, 2
          %s523 = scalar_select %p522, %s24, 2
          %p524 = scmp.lt.s32.totalorder %s25, 0
          %s525 = scalar_select %p524, %s25, 0
          %s526 = sadd.s32 %s525, %s523
          %s527 = scalar_lea.vmem %s2, %s526
        $region120: #{custom_loss.1} parent=115 // pred_fallthru
          _
        // Predicated region
        $region121: #{custom_loss.1} parent=115 // pred_check
          %p528 = pneg %p149
        $region122: #{custom_loss.1} parent=115 // pred_check_branch
          %530 = sbr.rel (%p528) target = $region124
        $region123: #{custom_loss.1} parent=115 // pred_region
          %p531 = scmp.lt.s32.totalorder %s24, 2
          %s532 = scalar_select %p531, %s24, 2
          %p533 = scmp.lt.s32.totalorder %s25, 0
          %s534 = scalar_select %p533, %s25, 0
          %s535 = sadd.s32 %s534, %s532
          %s536 = scalar_lea.vmem %s3, %s535
        $region124: #{custom_loss.1} parent=115 // pred_fallthru
          _
        // Predicated region
        $region125: #{custom_loss.1} parent=115 // pred_check
          %p537 = pneg %p177
        $region126: #{custom_loss.1} parent=115 // pred_check_branch
          %539 = sbr.rel (%p537) target = $region128
        $region127: #{custom_loss.1} parent=115 // pred_region
          %p540 = scmp.lt.s32.totalorder %s24, 2
          %s541 = scalar_select %p540, %s24, 2
          %p542 = scmp.lt.s32.totalorder %s25, 0
          %s543 = scalar_select %p542, %s25, 0
          %s544 = sadd.s32 %s543, %s541
          %s545 = scalar_lea.vmem %s4, %s544
        $region128: #{custom_loss.1} parent=115 // pred_fallthru
          _
      $region116: #{custom_loss.1} parent=5 // pred_fallthru
        _
    $region6: #{custom_loss.1} parent=1 // loop_footer
      %s15 = sadd.s32 1, %s11
    $region7: #{custom_loss.1} parent=1 // loop_footer_branch
      %10 = sbr.rel target = $region3
    $region8: #{custom_loss.1} parent=1 // loop_exit
      _

</llo_original>
